<compile_context>
chip_gen: v7x
topology: tpu7x:2x2x1
jax: 0.10.0
libtpu: 0.0.40
codegen_flags: <defaults>
</compile_context>

<pallas_src>
import jax
import jax.numpy as jnp
from jax.experimental import pallas as pl
from jax.experimental.pallas import tpu as pltpu


def _round_up(x, m):
    return ((x + m - 1) // m) * m


def bottle_classifier_kernel(x_ref, w1_ref, scale_ref, shift_ref,
                             w2_ref, b2_ref, o_ref):
    # In-kernel cast of the x tile to the matmul dtype (hides under the MXU).
    x = x_ref[...].astype(w1_ref.dtype)
    # Linear1 (MXU): bf16 operands, f32 accumulation. b1 is folded into shift.
    h = jnp.dot(x, w1_ref[...], preferred_element_type=jnp.float32)
    # BatchNorm1d (eval, running stats) + Linear1 bias folded into scale/shift.
    h = h * scale_ref[...] + shift_ref[...]
    # LeakyReLU(0.1): max(h, 0.1*h) is exact for a positive slope < 1.
    h = jnp.maximum(h, 0.1 * h)
    # Dropout(p=0.5) in eval mode == identity.
    # Classifier linear (MXU); output lane dim padded to a multiple of 128.
    y = jnp.dot(h.astype(w2_ref.dtype), w2_ref[...],
                preferred_element_type=jnp.float32)
    o_ref[...] = (y + b2_ref[...]).astype(o_ref.dtype)


def prepare_params(w1, b1, bn_gamma, bn_beta, bn_mean, bn_var, w2, b2,
                   *, eps=1e-5, use_bf16=True):
    """One-time parameter preparation (hoisted out of the per-call path)."""
    bottle_dim = w1.shape[1]
    out_dim = w2.shape[1]
    out_pad = _round_up(max(out_dim, 1), 128)     # lane-dense classifier head
    mm_dtype = jnp.bfloat16 if use_bf16 else jnp.float32

    # Fold BN running stats AND the Linear1 bias into per-feature scale/shift.
    scale = bn_gamma / jnp.sqrt(bn_var + eps)
    shift = b1 * scale + bn_beta - bn_mean * scale

    if out_pad != out_dim:
        w2 = jnp.pad(w2, ((0, 0), (0, out_pad - out_dim)))
        b2 = jnp.pad(b2, (0, out_pad - out_dim))

    return dict(
        w1=w1.astype(mm_dtype),
        scale=scale.reshape(1, bottle_dim).astype(jnp.float32),
        shift=shift.reshape(1, bottle_dim).astype(jnp.float32),
        w2=w2.astype(mm_dtype),
        b2=b2.reshape(1, out_pad).astype(jnp.float32),
        out_dim=out_dim,
    )


def _pick_bm(B, bm_max=512):
    """Batch tile + padded batch size.

    Prefers (a) no padding, (b) >=2 grid steps when the batch is big enough so
    both v7x TensorCores get work, (c) multiple-of-8 tiles (256-friendly for
    the v6e/v7x MXU when they exist as divisors).
    """
    if B <= 256:
        return B, B                                   # one full-extent tile, no pad
    cap = min(bm_max, B // 2)
    cap -= cap % 8
    for cand in range(cap, 7, -8):                    # largest mult-of-8 divisor
        if B % cand == 0:
            return cand, B
    if B <= bm_max:
        return B, B                                   # ragged medium batch, no pad
    # Rare fallback: pad the batch to a multiple of a 16-aligned half-batch tile.
    bm = min(bm_max, _round_up(pl.cdiv(B, 2), 16))
    return bm, _round_up(B, bm)


def bottle_classifier_forward(x, params, *, bm_max=512):
    """x: (B, in_dim) -> logits (B, out_dim), using prepare_params() output."""
    B, in_dim = x.shape
    w1, scale, shift = params["w1"], params["scale"], params["shift"]
    w2, b2, out_dim = params["w2"], params["b2"], params["out_dim"]
    bottle_dim = w1.shape[1]
    out_pad = w2.shape[1]
    out_dtype = x.dtype

    bm, b_pad = _pick_bm(B, bm_max)
    if b_pad != B:
        # Rare fallback path only; padded rows are sliced off below.
        x = jnp.pad(x, ((0, b_pad - B), (0, 0)))
    grid = (b_pad // bm,)

    # VMEM footprint: double-buffered x/out tiles + h intermediate + weights.
    isz = lambda a: jnp.dtype(a.dtype).itemsize
    tile_bytes = (2 * bm * in_dim * isz(x)
                  + 2 * bm * out_pad * jnp.dtype(out_dtype).itemsize
                  + 2 * bm * bottle_dim * 4)
    weight_bytes = (w1.size * isz(w1) + w2.size * isz(w2)
                    + (scale.size + shift.size + b2.size) * 4)
    try:
        vmem_cap = pltpu.get_tpu_info().vmem_capacity_bytes
    except Exception:
        vmem_cap = 64 * 1024 * 1024                  # v7x per-TC (smallest gen)
    vmem_limit = int(min(vmem_cap - (8 << 20),
                         max(tile_bytes + 2 * weight_bytes + (8 << 20), 32 << 20)))

    cost = pl.CostEstimate(
        flops=2 * b_pad * (in_dim * bottle_dim + bottle_dim * out_pad),
        transcendentals=0,
        bytes_accessed=(b_pad * in_dim * isz(x) + weight_bytes
                        + b_pad * out_pad * jnp.dtype(out_dtype).itemsize))

    def build(weight_buffers):
        if weight_buffers is None:
            wspec = lambda shape: pl.BlockSpec(shape, lambda i: (0, 0))
        else:
            wspec = lambda shape: pl.BlockSpec(
                shape, lambda i: (0, 0), pipeline_mode=pl.Buffered(weight_buffers))
        return pl.pallas_call(
            bottle_classifier_kernel,
            out_shape=jax.ShapeDtypeStruct((b_pad, out_pad), out_dtype),
            grid_spec=pltpu.PrefetchScalarGridSpec(
                num_scalar_prefetch=0,
                grid=grid,
                in_specs=[
                    pl.BlockSpec((bm, in_dim), lambda i: (i, 0)),   # x tile (orig dtype)
                    wspec((in_dim, bottle_dim)),                    # W1 (resident)
                    wspec((1, bottle_dim)),                         # BN scale
                    wspec((1, bottle_dim)),                         # BN shift (+b1)
                    wspec((bottle_dim, out_pad)),                   # W2 (lane-padded)
                    wspec((1, out_pad)),                            # b2 (lane-padded)
                ],
                out_specs=pl.BlockSpec((bm, out_pad), lambda i: (i, 0)),
            ),
            compiler_params=pltpu.CompilerParams(
                dimension_semantics=("parallel",),
                vmem_limit_bytes=vmem_limit),
            cost_estimate=cost,
        )

    try:
        # Grid-invariant operands stay resident across the batch grid; single-
        # buffer them to halve their VMEM footprint.
        out = build(1)(x, w1, scale, shift, w2, b2)
    except Exception:
        # TODO(synk): fallback for JAX versions without pipeline_mode=Buffered(1)
        # support on the top-level pallas_call pipeline (default double-buffering).
        out = build(None)(x, w1, scale, shift, w2, b2)

    # Strip batch padding (if any) and lane padding.
    return out[:B, :out_dim]


def init_params(key, in_dim, bottle_dim, out_dim):
    k1, k2, k3 = jax.random.split(key, 3)
    # Linear1: kaiming_normal_(mode='fan_out') -> std = sqrt(2 / fan_out)
    std1 = (2.0 / bottle_dim) ** 0.5
    w1 = std1 * jax.random.normal(k1, (in_dim, bottle_dim), jnp.float32)
    b1 = jnp.zeros((bottle_dim,), jnp.float32)
    # BatchNorm1d: weight ~ N(1, 0.02), bias = 0, running stats (0, 1)
    bn_gamma = 1.0 + 0.02 * jax.random.normal(k2, (bottle_dim,), jnp.float32)
    bn_beta = jnp.zeros((bottle_dim,), jnp.float32)
    bn_mean = jnp.zeros((bottle_dim,), jnp.float32)
    bn_var = jnp.ones((bottle_dim,), jnp.float32)
    # Classifier linear: normal std=0.001, bias = 0
    w2 = 0.001 * jax.random.normal(k3, (bottle_dim, out_dim), jnp.float32)
    b2 = jnp.zeros((out_dim,), jnp.float32)
    return w1, b1, bn_gamma, bn_beta, bn_mean, bn_var, w2, b2


def _reference(x, raw, eps=1e-5):
    # Plain-JAX reference with matched precision (bf16 matmul operands, f32
    # accumulation / elementwise) and eval-mode semantics.
    w1, b1, g, bta, mu, var, w2, b2 = raw
    mm = jnp.bfloat16
    h = jnp.dot(x.astype(mm), w1.astype(mm), preferred_element_type=jnp.float32)
    scale = g / jnp.sqrt(var + eps)
    h = h * scale + (b1 * scale + bta - mu * scale)
    h = jnp.maximum(h, 0.1 * h)
    return jnp.dot(h.astype(mm), w2.astype(mm),
                   preferred_element_type=jnp.float32) + b2


if __name__ == "__main__":
    key = jax.random.PRNGKey(0)
    kx, kx2, kp = jax.random.split(key, 3)

    # Small shapes consistent with the module; out_dim=10 exercises lane padding,
    # B=20 exercises the no-pad full-extent-tile path.
    B, in_dim, bottle_dim, out_dim = 20, 64, 128, 10

    x = jax.random.normal(kx, (B, in_dim), jnp.float32)
    raw = init_params(kp, in_dim, bottle_dim, out_dim)

    # One-time parameter preparation (hoisted out of the per-call path).
    params = prepare_params(*raw)

    out = bottle_classifier_forward(x, params)
    out = jax.block_until_ready(out)
    assert out.shape == (B, out_dim)
    ref = _reference(x, raw)
    assert jnp.allclose(out, ref, atol=1e-2, rtol=1e-2), (
        float(jnp.max(jnp.abs(out - ref))))

    # Also exercise the multi-step parallel batch grid (divisor tiling, no pad).
    B2 = 320
    x2 = jax.random.normal(kx2, (B2, in_dim), jnp.float32)
    out2 = jax.block_until_ready(bottle_classifier_forward(x2, params))
    assert out2.shape == (B2, out_dim)
    ref2 = _reference(x2, raw)
    assert jnp.allclose(out2, ref2, atol=1e-2, rtol=1e-2), (
        float(jnp.max(jnp.abs(out2 - ref2))))

    print("KERNEL_OK")
</pallas_src>

<mosaic_0001>
module attributes {stable_mosaic.version = 11 : i64} {
  func.func @bottle_classifier_kernel(%arg0: i32, %arg1: memref<20x64xf32, #tpu.memory_space<vmem>>, %arg2: memref<64x128xbf16, #tpu.memory_space<vmem>>, %arg3: memref<1x128xf32, #tpu.memory_space<vmem>>, %arg4: memref<1x128xf32, #tpu.memory_space<vmem>>, %arg5: memref<128x128xbf16, #tpu.memory_space<vmem>>, %arg6: memref<1x128xf32, #tpu.memory_space<vmem>>, %arg7: memref<20x128xf32, #tpu.memory_space<vmem>>) attributes {dimension_semantics = [#tpu.dimension_semantics<parallel>], iteration_bounds = array<i64: 1>, scalar_prefetch = 0 : i64, scratch_operands = 0 : i64, tpu.core_type = #tpu.core_type<tc>, window_params = [{transform_indices = @transform_0, window_bounds = array<i64: 20, 64>}, {pipeline_mode = #tpu.pipeline_mode<synchronous>, transform_indices = @transform_1, window_bounds = array<i64: 64, 128>}, {pipeline_mode = #tpu.pipeline_mode<synchronous>, transform_indices = @transform_2, window_bounds = array<i64: 1, 128>}, {pipeline_mode = #tpu.pipeline_mode<synchronous>, transform_indices = @transform_3, window_bounds = array<i64: 1, 128>}, {pipeline_mode = #tpu.pipeline_mode<synchronous>, transform_indices = @transform_4, window_bounds = array<i64: 128, 128>}, {pipeline_mode = #tpu.pipeline_mode<synchronous>, transform_indices = @transform_5, window_bounds = array<i64: 1, 128>}, {transform_indices = @transform_6, window_bounds = array<i64: 20, 128>}]} {
    %c0 = arith.constant 0 : index
    %c0_0 = arith.constant 0 : index
    %0 = vector.load %arg1[%c0, %c0_0] : memref<20x64xf32, #tpu.memory_space<vmem>>, vector<20x64xf32>
    %1 = arith.truncf %0 : vector<20x64xf32> to vector<20x64xbf16>
    %c0_1 = arith.constant 0 : index
    %c0_2 = arith.constant 0 : index
    %2 = vector.load %arg2[%c0_1, %c0_2] : memref<64x128xbf16, #tpu.memory_space<vmem>>, vector<64x128xbf16>
    %cst = arith.constant dense<0.000000e+00> : vector<20x128xf32>
    %3 = tpu.matmul %1, %2, %cst {dimension_numbers = #tpu.dot_dimension_numbers<[1], [0], [0], [1], [0, 0, 1, 1], [], []>} : vector<20x64xbf16>, vector<64x128xbf16>, vector<20x128xf32> -> vector<20x128xf32>
    %c0_3 = arith.constant 0 : index
    %c0_4 = arith.constant 0 : index
    %4 = vector.load %arg3[%c0_3, %c0_4] : memref<1x128xf32, #tpu.memory_space<vmem>>, vector<1x128xf32>
    %5 = vector.broadcast %4 : vector<1x128xf32> to vector<20x128xf32>
    %6 = arith.mulf %3, %5 : vector<20x128xf32>
    %c0_5 = arith.constant 0 : index
    %c0_6 = arith.constant 0 : index
    %7 = vector.load %arg4[%c0_5, %c0_6] : memref<1x128xf32, #tpu.memory_space<vmem>>, vector<1x128xf32>
    %8 = vector.broadcast %7 : vector<1x128xf32> to vector<20x128xf32>
    %9 = arith.addf %6, %8 : vector<20x128xf32>
    %cst_7 = arith.constant 1.000000e-01 : f32
    %10 = vector.broadcast %cst_7 : f32 to vector<20x128xf32>
    %11 = arith.mulf %10, %9 : vector<20x128xf32>
    %12 = arith.maximumf %9, %11 : vector<20x128xf32>
    %13 = arith.truncf %12 : vector<20x128xf32> to vector<20x128xbf16>
    %c0_8 = arith.constant 0 : index
    %c0_9 = arith.constant 0 : index
    %14 = vector.load %arg5[%c0_8, %c0_9] : memref<128x128xbf16, #tpu.memory_space<vmem>>, vector<128x128xbf16>
    %cst_10 = arith.constant dense<0.000000e+00> : vector<20x128xf32>
    %15 = tpu.matmul %13, %14, %cst_10 {dimension_numbers = #tpu.dot_dimension_numbers<[1], [0], [0], [1], [0, 0, 1, 1], [], []>} : vector<20x128xbf16>, vector<128x128xbf16>, vector<20x128xf32> -> vector<20x128xf32>
    %c0_11 = arith.constant 0 : index
    %c0_12 = arith.constant 0 : index
    %16 = vector.load %arg6[%c0_11, %c0_12] : memref<1x128xf32, #tpu.memory_space<vmem>>, vector<1x128xf32>
    %17 = vector.broadcast %16 : vector<1x128xf32> to vector<20x128xf32>
    %18 = arith.addf %15, %17 : vector<20x128xf32>
    %c0_13 = arith.constant 0 : index
    %c0_14 = arith.constant 0 : index
    %19 = vector.load %arg7[%c0_13, %c0_14] : memref<20x128xf32, #tpu.memory_space<vmem>>, vector<20x128xf32>
    tpu.vector_store %arg7[%c0_13, %c0_14], %18 {strides = array<i32>} : memref<20x128xf32, #tpu.memory_space<vmem>>, vector<20x128xf32>,
    return
  }
  func.func @transform_0(%arg0: i32) -> (i32, i32) {
    %c0_i32 = arith.constant 0 : i32
    %c0_i32_0 = arith.constant 0 : i32
    return %arg0, %c0_i32 : i32, i32
  }
  func.func @transform_1(%arg0: i32) -> (i32, i32) {
    %c0_i32 = arith.constant 0 : i32
    %c0_i32_0 = arith.constant 0 : i32
    %c0_i32_1 = arith.constant 0 : i32
    return %c0_i32, %c0_i32_0 : i32, i32
  }
  func.func @transform_2(%arg0: i32) -> (i32, i32) {
    %c0_i32 = arith.constant 0 : i32
    %c0_i32_0 = arith.constant 0 : i32
    %c0_i32_1 = arith.constant 0 : i32
    return %c0_i32, %c0_i32_0 : i32, i32
  }
  func.func @transform_3(%arg0: i32) -> (i32, i32) {
    %c0_i32 = arith.constant 0 : i32
    %c0_i32_0 = arith.constant 0 : i32
    %c0_i32_1 = arith.constant 0 : i32
    return %c0_i32, %c0_i32_0 : i32, i32
  }
  func.func @transform_4(%arg0: i32) -> (i32, i32) {
    %c0_i32 = arith.constant 0 : i32
    %c0_i32_0 = arith.constant 0 : i32
    %c0_i32_1 = arith.constant 0 : i32
    return %c0_i32, %c0_i32_0 : i32, i32
  }
  func.func @transform_5(%arg0: i32) -> (i32, i32) {
    %c0_i32 = arith.constant 0 : i32
    %c0_i32_0 = arith.constant 0 : i32
    %c0_i32_1 = arith.constant 0 : i32
    return %c0_i32, %c0_i32_0 : i32, i32
  }
  func.func @transform_6(%arg0: i32) -> (i32, i32) {
    %c0_i32 = arith.constant 0 : i32
    %c0_i32_0 = arith.constant 0 : i32
    return %arg0, %c0_i32 : i32, i32
  }
}

module attributes {stable_mosaic.version = 11 : i64} {
  func.func @bottle_classifier_kernel(%arg0: i32, %arg1: memref<20x64xf32, #tpu.memory_space<vmem>>, %arg2: memref<64x128xbf16, #tpu.memory_space<vmem>>, %arg3: memref<1x128xf32, #tpu.memory_space<vmem>>, %arg4: memref<1x128xf32, #tpu.memory_space<vmem>>, %arg5: memref<128x128xbf16, #tpu.memory_space<vmem>>, %arg6: memref<1x128xf32, #tpu.memory_space<vmem>>, %arg7: memref<20x128xf32, #tpu.memory_space<vmem>>) attributes {dimension_semantics = [#tpu.dimension_semantics<parallel>], iteration_bounds = array<i64: 1>, scalar_prefetch = 0 : i64, scratch_operands = 0 : i64, tpu.core_type = #tpu.core_type<tc>, window_params = [{transform_indices = @transform_0, window_bounds = array<i64: 20, 64>}, {pipeline_mode = #tpu.pipeline_mode<synchronous>, transform_indices = @transform_1, window_bounds = array<i64: 64, 128>}, {pipeline_mode = #tpu.pipeline_mode<synchronous>, transform_indices = @transform_2, window_bounds = array<i64: 1, 128>}, {pipeline_mode = #tpu.pipeline_mode<synchronous>, transform_indices = @transform_3, window_bounds = array<i64: 1, 128>}, {pipeline_mode = #tpu.pipeline_mode<synchronous>, transform_indices = @transform_4, window_bounds = array<i64: 128, 128>}, {pipeline_mode = #tpu.pipeline_mode<synchronous>, transform_indices = @transform_5, window_bounds = array<i64: 1, 128>}, {transform_indices = @transform_6, window_bounds = array<i64: 20, 128>}]} {
    %c0 = arith.constant 0 : index
    %c0_0 = arith.constant 0 : index
    %0 = vector.load %arg1[%c0, %c0_0] : memref<20x64xf32, #tpu.memory_space<vmem>>, vector<20x64xf32>
    %1 = arith.truncf %0 : vector<20x64xf32> to vector<20x64xbf16>
    %c0_1 = arith.constant 0 : index
    %c0_2 = arith.constant 0 : index
    %2 = vector.load %arg2[%c0_1, %c0_2] : memref<64x128xbf16, #tpu.memory_space<vmem>>, vector<64x128xbf16>
    %cst = arith.constant dense<0.000000e+00> : vector<20x128xf32>
    %3 = tpu.matmul %1, %2, %cst {dimension_numbers = #tpu.dot_dimension_numbers<[1], [0], [0], [1], [0, 0, 1, 1], [], []>} : vector<20x64xbf16>, vector<64x128xbf16>, vector<20x128xf32> -> vector<20x128xf32>
    %c0_3 = arith.constant 0 : index
    %c0_4 = arith.constant 0 : index
    %4 = vector.load %arg3[%c0_3, %c0_4] : memref<1x128xf32, #tpu.memory_space<vmem>>, vector<1x128xf32>
    %5 = vector.broadcast %4 : vector<1x128xf32> to vector<20x128xf32>
    %6 = arith.mulf %3, %5 : vector<20x128xf32>
    %c0_5 = arith.constant 0 : index
    %c0_6 = arith.constant 0 : index
    %7 = vector.load %arg4[%c0_5, %c0_6] : memref<1x128xf32, #tpu.memory_space<vmem>>, vector<1x128xf32>
    %8 = vector.broadcast %7 : vector<1x128xf32> to vector<20x128xf32>
    %9 = arith.addf %6, %8 : vector<20x128xf32>
    %cst_7 = arith.constant 1.000000e-01 : f32
    %10 = vector.broadcast %cst_7 : f32 to vector<20x128xf32>
    %11 = arith.mulf %10, %9 : vector<20x128xf32>
    %12 = arith.maximumf %9, %11 : vector<20x128xf32>
    %13 = arith.truncf %12 : vector<20x128xf32> to vector<20x128xbf16>
    %c0_8 = arith.constant 0 : index
    %c0_9 = arith.constant 0 : index
    %14 = vector.load %arg5[%c0_8, %c0_9] : memref<128x128xbf16, #tpu.memory_space<vmem>>, vector<128x128xbf16>
    %cst_10 = arith.constant dense<0.000000e+00> : vector<20x128xf32>
    %15 = tpu.matmul %13, %14, %cst_10 {dimension_numbers = #tpu.dot_dimension_numbers<[1], [0], [0], [1], [0, 0, 1, 1], [], []>} : vector<20x128xbf16>, vector<128x128xbf16>, vector<20x128xf32> -> vector<20x128xf32>
    %c0_11 = arith.constant 0 : index
    %c0_12 = arith.constant 0 : index
    %16 = vector.load %arg6[%c0_11, %c0_12] : memref<1x128xf32, #tpu.memory_space<vmem>>, vector<1x128xf32>
    %17 = vector.broadcast %16 : vector<1x128xf32> to vector<20x128xf32>
    %18 = arith.addf %15, %17 : vector<20x128xf32>
    %c0_13 = arith.constant 0 : index
    %c0_14 = arith.constant 0 : index
    %19 = vector.load %arg7[%c0_13, %c0_14] : memref<20x128xf32, #tpu.memory_space<vmem>>, vector<20x128xf32>
    tpu.vector_store %arg7[%c0_13, %c0_14], %18 {strides = array<i32>} : memref<20x128xf32, #tpu.memory_space<vmem>>, vector<20x128xf32>,
    return
  }
  func.func @transform_0(%arg0: i32) -> (i32, i32) {
    %c0_i32 = arith.constant 0 : i32
    %c0_i32_0 = arith.constant 0 : i32
    return %arg0, %c0_i32 : i32, i32
  }
  func.func @transform_1(%arg0: i32) -> (i32, i32) {
    %c0_i32 = arith.constant 0 : i32
    %c0_i32_0 = arith.constant 0 : i32
    %c0_i32_1 = arith.constant 0 : i32
    return %c0_i32, %c0_i32_0 : i32, i32
  }
  func.func @transform_2(%arg0: i32) -> (i32, i32) {
    %c0_i32 = arith.constant 0 : i32
    %c0_i32_0 = arith.constant 0 : i32
    %c0_i32_1 = arith.constant 0 : i32
    return %c0_i32, %c0_i32_0 : i32, i32
  }
  func.func @transform_3(%arg0: i32) -> (i32, i32) {
    %c0_i32 = arith.constant 0 : i32
    %c0_i32_0 = arith.constant 0 : i32
    %c0_i32_1 = arith.constant 0 : i32
    return %c0_i32, %c0_i32_0 : i32, i32
  }
  func.func @transform_4(%arg0: i32) -> (i32, i32) {
    %c0_i32 = arith.constant 0 : i32
    %c0_i32_0 = arith.constant 0 : i32
    %c0_i32_1 = arith.constant 0 : i32
    return %c0_i32, %c0_i32_0 : i32, i32
  }
  func.func @transform_5(%arg0: i32) -> (i32, i32) {
    %c0_i32 = arith.constant 0 : i32
    %c0_i32_0 = arith.constant 0 : i32
    %c0_i32_1 = arith.constant 0 : i32
    return %c0_i32, %c0_i32_0 : i32, i32
  }
  func.func @transform_6(%arg0: i32) -> (i32, i32) {
    %c0_i32 = arith.constant 0 : i32
    %c0_i32_0 = arith.constant 0 : i32
    return %arg0, %c0_i32 : i32, i32
  }
}

</mosaic_0001>

<llo_original>
// kernel: tpu_custom_call.1
$region0: #{tpu_custom_call.1}
  #allocation0 [shape = 'u32[]', space=smem, size = 0x4, offset = 0x4, fixed_abs, tag = 'smem constant byte address 0x4 - core index']
  #allocation1 [shape = 'u32[144,128]{1,0:T(1,128)}', space=vmem, size = 0x12000, scoped, tag = 'internal scratch']
  %s0 = inlined_call_operand.hbm [shape: f32[20,64], index: 0, kind: input, shape index: {}]
  %s1 = inlined_call_operand.hbm [shape: bf16[64,128], index: 1, kind: input, shape index: {}]
  %s2 = inlined_call_operand.vmem [shape: f32[1,128], index: 2, kind: input, shape index: {}]
  %s3 = inlined_call_operand.vmem [shape: f32[1,128], index: 3, kind: input, shape index: {}]
  %s4 = inlined_call_operand.hbm [shape: bf16[128,128], index: 4, kind: input, shape index: {}]
  %s5 = inlined_call_operand.vmem [shape: f32[1,128], index: 5, kind: input, shape index: {}]
  %s6 = inlined_call_operand.hbm [shape: f32[20,128], index: 6, kind: output, shape index: {}]
  %s7 = sld [smem:[#allocation0]]
  $region46: #{tpu_custom_call.1} parent=0
    _
  %s9 = ssub.s32 1, %s7
  %s10 = scalar_select 0, %s9, %s7
  $region1: #{tpu_custom_call.1} parent=0
    #allocation2 [shape = 'u8[12288]{0}', space=vmem, size = 0x3000, scoped, tag = 'input window, operand 0, single buffered']
    #allocation3 [shape = 's32[1]{0}', space=sflag, size = 0x4, scoped, tag = 'scoped memory for tpu_custom_call.1']
    #allocation4 [shape = 's32[1]{0}', space=sflag, size = 0x4, scoped, tag = 'scoped memory for tpu_custom_call.1']
    #allocation5 [shape = 'u8[16384]{0}', space=vmem, size = 0x4000, scoped, tag = 'input window, operand 1, single buffered']
    #allocation6 [shape = 's32[1]{0}', space=sflag, size = 0x4, scoped, tag = 'scoped memory for tpu_custom_call.1']
    #allocation7 [shape = 'u8[32768]{0}', space=vmem, size = 0x8000, scoped, tag = 'input window, operand 4, single buffered']
    #allocation8 [shape = 'u8[12288]{0}', space=vmem, size = 0x3000, scoped, tag = 'output window, operand 0, single buffered']
    %11 = vsyncpa [#allocation3], 0
    %12 = vsyncpa [#allocation6], 0
    %13 = vsyncpa [#allocation4], 0
    // Predicated region
    $region2: #{tpu_custom_call.1} parent=1 // pred_check
      _
    $region3: #{tpu_custom_call.1} parent=1 // pred_check_branch
      %15 = sbr.rel (0) target = $region5
    $region4: #{tpu_custom_call.1} parent=1 // pred_region
      %s17 = ssub.s32 384, 384
      %18 = vsyncadd [#allocation3], %s17
      %s19 = sshll.u32 [#allocation2], 4
      %s20 = int_to_ptr.vmem [resolvable:$true] %s19
      %25 = dma.hbm_to_vmem [thread:$0]  %s0, 384, %s20, [#allocation3], 128, 128, 8
    $region5: #{tpu_custom_call.1} parent=1 // pred_fallthru
      _
    // Predicated region
    $region6: #{tpu_custom_call.1} parent=1 // pred_check
      _
    $region7: #{tpu_custom_call.1} parent=1 // pred_check_branch
      %27 = sbr.rel (0) target = $region9
    $region8: #{tpu_custom_call.1} parent=1 // pred_region
      %s29 = ssub.s32 512, 512
      %30 = vsyncadd [#allocation6], %s29
      %s31 = sshll.u32 [#allocation5], 4
      %s32 = int_to_ptr.vmem [resolvable:$true] %s31
      %37 = dma.hbm_to_vmem [thread:$0]  %s1, 512, %s32, [#allocation6], 64, 64, 4
    $region9: #{tpu_custom_call.1} parent=1 // pred_fallthru
      _
    // Predicated region
    $region10: #{tpu_custom_call.1} parent=1 // pred_check
      _
    $region11: #{tpu_custom_call.1} parent=1 // pred_check_branch
      %39 = sbr.rel (0) target = $region13
    $region12: #{tpu_custom_call.1} parent=1 // pred_region
      _
    $region13: #{tpu_custom_call.1} parent=1 // pred_fallthru
      _
    // Predicated region
    $region14: #{tpu_custom_call.1} parent=1 // pred_check
      _
    $region15: #{tpu_custom_call.1} parent=1 // pred_check_branch
      %41 = sbr.rel (0) target = $region17
    $region16: #{tpu_custom_call.1} parent=1 // pred_region
      _
    $region17: #{tpu_custom_call.1} parent=1 // pred_fallthru
      _
    // Predicated region
    $region18: #{tpu_custom_call.1} parent=1 // pred_check
      _
    $region19: #{tpu_custom_call.1} parent=1 // pred_check_branch
      %43 = sbr.rel (0) target = $region21
    $region20: #{tpu_custom_call.1} parent=1 // pred_region
      %s45 = ssub.s32 1024, 1024
      %46 = vsyncadd [#allocation6], %s45
      %s47 = sshll.u32 [#allocation7], 4
      %s48 = int_to_ptr.vmem [resolvable:$true] %s47
      %53 = dma.hbm_to_vmem [thread:$0]  %s4, 1024, %s48, [#allocation6], 64, 64, 4
    $region21: #{tpu_custom_call.1} parent=1 // pred_fallthru
      _
    // Predicated region
    $region22: #{tpu_custom_call.1} parent=1 // pred_check
      _
    $region23: #{tpu_custom_call.1} parent=1 // pred_check_branch
      %55 = sbr.rel (0) target = $region25
    $region24: #{tpu_custom_call.1} parent=1 // pred_region
      _
    $region25: #{tpu_custom_call.1} parent=1 // pred_fallthru
      _
    // Predicated region
    $region26: #{tpu_custom_call.1} parent=1 // pred_check
      _
    $region27: #{tpu_custom_call.1} parent=1 // pred_check_branch
      %57 = sbr.rel (0) target = $region29
    $region28: #{tpu_custom_call.1} parent=1 // pred_region
      %58 = dma.done [#allocation3], 384
    $region29: #{tpu_custom_call.1} parent=1 // pred_fallthru
      _
    // Predicated region
    $region30: #{tpu_custom_call.1} parent=1 // pred_check
      _
    $region31: #{tpu_custom_call.1} parent=1 // pred_check_branch
      %60 = sbr.rel (0) target = $region33
    $region32: #{tpu_custom_call.1} parent=1 // pred_region
      %61 = dma.done [#allocation6], 512
    $region33: #{tpu_custom_call.1} parent=1 // pred_fallthru
      _
    // Predicated region
    $region34: #{tpu_custom_call.1} parent=1 // pred_check
      _
    $region35: #{tpu_custom_call.1} parent=1 // pred_check_branch
      %63 = sbr.rel (0) target = $region37
    $region36: #{tpu_custom_call.1} parent=1 // pred_region
      %64 = dma.done [#allocation6], 1024
    $region37: #{tpu_custom_call.1} parent=1 // pred_fallthru
      _
    %v66 = vld [vmem:[#allocation2] sm:$0xff]
    %v67 = vld [vmem:[#allocation2 + $0x8] sm:$0xff]
    %v68 = vld [vmem:[#allocation2 + $0x10] sm:$0xf]
    %v69 = vpack.c.bf16 %v67, %v66
    %v70 = vpack.c.bf16 %v68, %v68
    %v71 = vld [vmem:[#allocation5] sm:$0xf]
    %v72 = vld [vmem:[#allocation5 + $0x4] sm:$0xf]
    %v73 = vld [vmem:[#allocation5 + $0x8] sm:$0xf]
    %v74 = vld [vmem:[#allocation5 + $0xc] sm:$0xf]
    %v75 = vld [vmem:[#allocation5 + $0x10] sm:$0xf]
    %v76 = vld [vmem:[#allocation5 + $0x14] sm:$0xf]
    %v77 = vld [vmem:[#allocation5 + $0x18] sm:$0xf]
    %v78 = vld [vmem:[#allocation5 + $0x1c] sm:$0xf]
    %v87 = vunpack.c.l.b16 %v71
    %v88 = vunpack.c.l.b16 %v72
    %v89 = vunpack.c.l.b16 %v73
    %v90 = vunpack.c.l.b16 %v74
    %v91 = vunpack.c.l.b16 %v75
    %v92 = vunpack.c.l.b16 %v76
    %v93 = vunpack.c.l.b16 %v77
    %v94 = vunpack.c.l.b16 %v78
    %v95 = vpack.c.b16 %v88, %v87
    %v96 = vpack.c.b16 %v90, %v89
    %v97 = vpack.c.b16 %v92, %v91
    %v98 = vpack.c.b16 %v94, %v93
    %vm103 = vcmask 523264
    %v105 = vsel %vm103, %v69, 0
    %v108 = vsel %vm103, %v70, 0
    %110 = vmatprep.subr.bf16.mxu0 0
    %111 = vmatpush1.bf16.msra.mxu0 %v95
    %112 = vmatprep.subr.bf16.mxu0 0
    %113 = vmatpush1.bf16.msra.mxu0 %v96
    %114 = vmatprep.subr.bf16.mxu0 0
    %115 = vmatpush1.bf16.msra.mxu0 %v97
    %116 = vmatprep.subr.bf16.mxu0 0
    %117 = vmatpush1.bf16.msra.mxu0 %v98
    %118 = vmatprep.subr.bf16.mxu0 0
    %119 = vmatpush1.bf16.msra.mxu0 0
    %120 = vmatprep.subr.bf16.mxu0 0
    %121 = vmatpush1.bf16.msra.mxu0 0
    %122 = vmatprep.subr.bf16.mxu0 0
    %123 = vmatpush1.bf16.msra.mxu0 0
    %124 = vmatprep.subr.bf16.mxu0 0
    %125 = vmatpush1.bf16.msra.mxu0 0
    %126 = vmatprep.subr.bf16.mxu0 0
    %127 = vmatpush1.bf16.msra.mxu0 0
    %128 = vmatprep.subr.bf16.mxu0 0
    %129 = vmatpush1.bf16.msra.mxu0 0
    %130 = vmatprep.subr.bf16.mxu0 0
    %131 = vmatpush1.bf16.msra.mxu0 0
    %132 = vmatprep.subr.bf16.mxu0 0
    %133 = vmatpush1.bf16.msra.mxu0 0
    %134 = vmatprep.subr.bf16.mxu0 0
    %135 = vmatpush1.bf16.msra.mxu0 0
    %136 = vmatprep.subr.bf16.mxu0 0
    %137 = vmatpush1.bf16.msra.mxu0 0
    %138 = vmatprep.subr.bf16.mxu0 0
    %139 = vmatpush1.bf16.msra.mxu0 0
    %140 = vmatprep.subr.bf16.mxu0 0
    %141 = vmatpush1.bf16.msra.mxu0 0
    %142 = vmatprep.mubr.bf16.mxu0 0
    %143 = vmatmul.mubr.bf16.gmra.mrb[0].mxu0 %v105
    %v144 = vpop.f32.mrb[0].mxu0
    %v145 = vadd.f32 0.0, %v144
    %v146 = vpop.f32.mrb[0].mxu0
    %v147 = vpop.f32.mrb[0].mxu0
    %v148 = vadd.f32 0.0, %v147
    %v149 = vpop.f32.mrb[0].mxu0
    %150 = vmatprep.mubr.bf16.mxu0 0
    %151 = vmatmul.mubr.bf16.gmra.mrb[0].mxu0 %v108
    %v152 = vpop.f32.mrb[0].mxu0
    %v153 = vadd.f32 0.0, %v152
    %v154 = vpop.f32.mrb[0].mxu0
    %v155 = vpop.f32.mrb[0].mxu0
    %v156 = vpop.f32.mrb[0].mxu0
    %157 = vdwg.mxu0
    %v158 = vld [vmem:[%s2] sm:$0x1]
    %v160 = vlaneseq
    %v161 = vshrl.u32 %v160, 7
    %v162 = vsub.s32 0, %v161
    %v163 = vrot.slane %v158, %v162
    %v165 = vmul.f32 %v145, %v163
    %v166 = vmul.f32 %v148, %v163
    %v167 = vmul.f32 %v153, %v163
    %v168 = vld [vmem:[%s3] sm:$0x1]
    %v170 = vlaneseq
    %v171 = vshrl.u32 %v170, 7
    %v172 = vsub.s32 0, %v171
    %v173 = vrot.slane %v168, %v172
    %v175 = vadd.f32 %v165, %v173
    %v176 = vadd.f32 %v166, %v173
    %v177 = vadd.f32 %v167, %v173
    %v178 = vmul.f32 %v175, 0.1
    %v179 = vmul.f32 %v176, 0.1
    %v180 = vmul.f32 %v177, 0.1
    %v181 = vmax.f32 %v175, %v178
    %v182 = vmax.f32 %v176, %v179
    %v183 = vmax.f32 %v177, %v180
    %v184 = vpack.c.bf16 %v182, %v181
    %v185 = vpack.c.bf16 %v183, %v183
    %v186 = vld [vmem:[#allocation7] sm:$0xf]
    %v187 = vld [vmem:[#allocation7 + $0x4] sm:$0xf]
    %v188 = vld [vmem:[#allocation7 + $0x8] sm:$0xf]
    %v189 = vld [vmem:[#allocation7 + $0xc] sm:$0xf]
    %v190 = vld [vmem:[#allocation7 + $0x10] sm:$0xf]
    %v191 = vld [vmem:[#allocation7 + $0x14] sm:$0xf]
    %v192 = vld [vmem:[#allocation7 + $0x18] sm:$0xf]
    %v193 = vld [vmem:[#allocation7 + $0x1c] sm:$0xf]
    %v194 = vld [vmem:[#allocation7 + $0x20] sm:$0xf]
    %v195 = vld [vmem:[#allocation7 + $0x24] sm:$0xf]
    %v196 = vld [vmem:[#allocation7 + $0x28] sm:$0xf]
    %v197 = vld [vmem:[#allocation7 + $0x2c] sm:$0xf]
    %v198 = vld [vmem:[#allocation7 + $0x30] sm:$0xf]
    %v199 = vld [vmem:[#allocation7 + $0x34] sm:$0xf]
    %v200 = vld [vmem:[#allocation7 + $0x38] sm:$0xf]
    %v201 = vld [vmem:[#allocation7 + $0x3c] sm:$0xf]
    %v202 = vld [vmem:[%s5] sm:$0x1]
    %v204 = vlaneseq
    %v205 = vshrl.u32 %v204, 7
    %v206 = vsub.s32 0, %v205
    %v207 = vrot.slane %v202, %v206
    %v225 = vunpack.c.l.b16 %v186
    %v226 = vunpack.c.l.b16 %v187
    %v227 = vunpack.c.l.b16 %v188
    %v228 = vunpack.c.l.b16 %v189
    %v229 = vunpack.c.l.b16 %v190
    %v230 = vunpack.c.l.b16 %v191
    %v231 = vunpack.c.l.b16 %v192
    %v232 = vunpack.c.l.b16 %v193
    %v233 = vunpack.c.l.b16 %v194
    %v234 = vunpack.c.l.b16 %v195
    %v235 = vunpack.c.l.b16 %v196
    %v236 = vunpack.c.l.b16 %v197
    %v237 = vunpack.c.l.b16 %v198
    %v238 = vunpack.c.l.b16 %v199
    %v239 = vunpack.c.l.b16 %v200
    %v240 = vunpack.c.l.b16 %v201
    %v241 = vpack.c.b16 %v226, %v225
    %v242 = vpack.c.b16 %v228, %v227
    %v243 = vpack.c.b16 %v230, %v229
    %v244 = vpack.c.b16 %v232, %v231
    %v245 = vpack.c.b16 %v234, %v233
    %v246 = vpack.c.b16 %v236, %v235
    %v247 = vpack.c.b16 %v238, %v237
    %v248 = vpack.c.b16 %v240, %v239
    %257 = vmatprep.subr.bf16.mxu0 0
    %258 = vmatpush1.bf16.msra.mxu0 %v241
    %259 = vmatprep.subr.bf16.mxu0 0
    %260 = vmatpush1.bf16.msra.mxu0 %v242
    %261 = vmatprep.subr.bf16.mxu0 0
    %262 = vmatpush1.bf16.msra.mxu0 %v243
    %263 = vmatprep.subr.bf16.mxu0 0
    %264 = vmatpush1.bf16.msra.mxu0 %v244
    %265 = vmatprep.subr.bf16.mxu0 0
    %266 = vmatpush1.bf16.msra.mxu0 %v245
    %267 = vmatprep.subr.bf16.mxu0 0
    %268 = vmatpush1.bf16.msra.mxu0 %v246
    %269 = vmatprep.subr.bf16.mxu0 0
    %270 = vmatpush1.bf16.msra.mxu0 %v247
    %271 = vmatprep.subr.bf16.mxu0 0
    %272 = vmatpush1.bf16.msra.mxu0 %v248
    %273 = vmatprep.subr.bf16.mxu0 0
    %274 = vmatpush1.bf16.msra.mxu0 0
    %275 = vmatprep.subr.bf16.mxu0 0
    %276 = vmatpush1.bf16.msra.mxu0 0
    %277 = vmatprep.subr.bf16.mxu0 0
    %278 = vmatpush1.bf16.msra.mxu0 0
    %279 = vmatprep.subr.bf16.mxu0 0
    %280 = vmatpush1.bf16.msra.mxu0 0
    %281 = vmatprep.subr.bf16.mxu0 0
    %282 = vmatpush1.bf16.msra.mxu0 0
    %283 = vmatprep.subr.bf16.mxu0 0
    %284 = vmatpush1.bf16.msra.mxu0 0
    %285 = vmatprep.subr.bf16.mxu0 0
    %286 = vmatpush1.bf16.msra.mxu0 0
    %287 = vmatprep.subr.bf16.mxu0 0
    %288 = vmatpush1.bf16.msra.mxu0 0
    %289 = vmatprep.mubr.bf16.mxu0 0
    %290 = vmatmul.mubr.bf16.gmra.mrb[0].mxu0 %v184
    %v291 = vpop.f32.mrb[0].mxu0
    %v292 = vadd.f32 %v207, %v291
    %v293 = vpop.f32.mrb[0].mxu0
    %v294 = vpop.f32.mrb[0].mxu0
    %v295 = vadd.f32 %v207, %v294
    %v296 = vpop.f32.mrb[0].mxu0
    %297 = vmatprep.mubr.bf16.mxu0 0
    %298 = vmatmul.mubr.bf16.gmra.mrb[0].mxu0 %v185
    %v299 = vpop.f32.mrb[0].mxu0
    %v300 = vadd.f32 %v207, %v299
    %v301 = vpop.f32.mrb[0].mxu0
    %v302 = vpop.f32.mrb[0].mxu0
    %v303 = vpop.f32.mrb[0].mxu0
    %304 = vdwg.mxu0
    %305 = vst [vmem:[#allocation8] sm:$0xff] %v292
    %306 = vst [vmem:[#allocation8 + $0x8] sm:$0xff] %v295
    %307 = vst [vmem:[#allocation8 + $0x10] sm:$0xf] %v300
    // Predicated region
    $region38: #{tpu_custom_call.1} parent=1 // pred_check
      _
    $region39: #{tpu_custom_call.1} parent=1 // pred_check_branch
      %309 = sbr.rel (0) target = $region41
    $region40: #{tpu_custom_call.1} parent=1 // pred_region
      %s311 = ssub.s32 384, 384
      %312 = vsyncadd [#allocation4], %s311
      %s313 = sshll.u32 [#allocation8], 4
      %s314 = int_to_ptr.vmem [resolvable:$true] %s313
      %319 = dma.vmem_to_hbm [thread:$0]  %s314, 384, %s6, [#allocation4], 128, 128, 8
    $region41: #{tpu_custom_call.1} parent=1 // pred_fallthru
      _
    // Predicated region
    $region42: #{tpu_custom_call.1} parent=1 // pred_check
      _
    $region43: #{tpu_custom_call.1} parent=1 // pred_check_branch
      %321 = sbr.rel (0) target = $region45
    $region44: #{tpu_custom_call.1} parent=1 // pred_region
      %322 = dma.done [#allocation4], 384
    $region45: #{tpu_custom_call.1} parent=1 // pred_fallthru
      _
    %323 = vsyncpa [#allocation3], 1
    %324 = vsyncpa [#allocation6], 1
    %325 = vsyncpa [#allocation4], 1

// kernel: tpu_custom_call.1
$region0: #{tpu_custom_call.1}
  #allocation0 [shape = 'u32[]', space=smem, size = 0x4, offset = 0x4, fixed_abs, tag = 'smem constant byte address 0x4 - core index']
  #allocation1 [shape = 'u32[144,128]{1,0:T(1,128)}', space=vmem, size = 0x12000, scoped, tag = 'internal scratch']
  %s0 = inlined_call_operand.hbm [shape: f32[20,64], index: 0, kind: input, shape index: {}]
  %s1 = inlined_call_operand.hbm [shape: bf16[64,128], index: 1, kind: input, shape index: {}]
  %s2 = inlined_call_operand.vmem [shape: f32[1,128], index: 2, kind: input, shape index: {}]
  %s3 = inlined_call_operand.vmem [shape: f32[1,128], index: 3, kind: input, shape index: {}]
  %s4 = inlined_call_operand.hbm [shape: bf16[128,128], index: 4, kind: input, shape index: {}]
  %s5 = inlined_call_operand.vmem [shape: f32[1,128], index: 5, kind: input, shape index: {}]
  %s6 = inlined_call_operand.hbm [shape: f32[20,128], index: 6, kind: output, shape index: {}]
  %s7 = sld [smem:[#allocation0]]
  $region46: #{tpu_custom_call.1} parent=0
    _
  %s9 = ssub.s32 1, %s7
  %s10 = scalar_select 0, %s9, %s7
  $region1: #{tpu_custom_call.1} parent=0
    #allocation2 [shape = 'u8[12288]{0}', space=vmem, size = 0x3000, scoped, tag = 'input window, operand 0, single buffered']
    #allocation3 [shape = 's32[1]{0}', space=sflag, size = 0x4, scoped, tag = 'scoped memory for tpu_custom_call.1']
    #allocation4 [shape = 's32[1]{0}', space=sflag, size = 0x4, scoped, tag = 'scoped memory for tpu_custom_call.1']
    #allocation5 [shape = 'u8[16384]{0}', space=vmem, size = 0x4000, scoped, tag = 'input window, operand 1, single buffered']
    #allocation6 [shape = 's32[1]{0}', space=sflag, size = 0x4, scoped, tag = 'scoped memory for tpu_custom_call.1']
    #allocation7 [shape = 'u8[32768]{0}', space=vmem, size = 0x8000, scoped, tag = 'input window, operand 4, single buffered']
    #allocation8 [shape = 'u8[12288]{0}', space=vmem, size = 0x3000, scoped, tag = 'output window, operand 0, single buffered']
    %11 = vsyncpa [#allocation3], 0
    %12 = vsyncpa [#allocation6], 0
    %13 = vsyncpa [#allocation4], 0
    // Predicated region
    $region2: #{tpu_custom_call.1} parent=1 // pred_check
      _
    $region3: #{tpu_custom_call.1} parent=1 // pred_check_branch
      %15 = sbr.rel (0) target = $region5
    $region4: #{tpu_custom_call.1} parent=1 // pred_region
      %s17 = ssub.s32 384, 384
      %18 = vsyncadd [#allocation3], %s17
      %s19 = sshll.u32 [#allocation2], 4
      %s20 = int_to_ptr.vmem [resolvable:$true] %s19
      %25 = dma.hbm_to_vmem [thread:$0]  %s0, 384, %s20, [#allocation3], 128, 128, 8
    $region5: #{tpu_custom_call.1} parent=1 // pred_fallthru
      _
    // Predicated region
    $region6: #{tpu_custom_call.1} parent=1 // pred_check
      _
    $region7: #{tpu_custom_call.1} parent=1 // pred_check_branch
      %27 = sbr.rel (0) target = $region9
    $region8: #{tpu_custom_call.1} parent=1 // pred_region
      %s29 = ssub.s32 512, 512
      %30 = vsyncadd [#allocation6], %s29
      %s31 = sshll.u32 [#allocation5], 4
      %s32 = int_to_ptr.vmem [resolvable:$true] %s31
      %37 = dma.hbm_to_vmem [thread:$0]  %s1, 512, %s32, [#allocation6], 64, 64, 4
    $region9: #{tpu_custom_call.1} parent=1 // pred_fallthru
      _
    // Predicated region
    $region10: #{tpu_custom_call.1} parent=1 // pred_check
      _
    $region11: #{tpu_custom_call.1} parent=1 // pred_check_branch
      %39 = sbr.rel (0) target = $region13
    $region12: #{tpu_custom_call.1} parent=1 // pred_region
      _
    $region13: #{tpu_custom_call.1} parent=1 // pred_fallthru
      _
    // Predicated region
    $region14: #{tpu_custom_call.1} parent=1 // pred_check
      _
    $region15: #{tpu_custom_call.1} parent=1 // pred_check_branch
      %41 = sbr.rel (0) target = $region17
    $region16: #{tpu_custom_call.1} parent=1 // pred_region
      _
    $region17: #{tpu_custom_call.1} parent=1 // pred_fallthru
      _
    // Predicated region
    $region18: #{tpu_custom_call.1} parent=1 // pred_check
      _
    $region19: #{tpu_custom_call.1} parent=1 // pred_check_branch
      %43 = sbr.rel (0) target = $region21
    $region20: #{tpu_custom_call.1} parent=1 // pred_region
      %s45 = ssub.s32 1024, 1024
      %46 = vsyncadd [#allocation6], %s45
      %s47 = sshll.u32 [#allocation7], 4
      %s48 = int_to_ptr.vmem [resolvable:$true] %s47
      %53 = dma.hbm_to_vmem [thread:$0]  %s4, 1024, %s48, [#allocation6], 64, 64, 4
    $region21: #{tpu_custom_call.1} parent=1 // pred_fallthru
      _
    // Predicated region
    $region22: #{tpu_custom_call.1} parent=1 // pred_check
      _
    $region23: #{tpu_custom_call.1} parent=1 // pred_check_branch
      %55 = sbr.rel (0) target = $region25
    $region24: #{tpu_custom_call.1} parent=1 // pred_region
      _
    $region25: #{tpu_custom_call.1} parent=1 // pred_fallthru
      _
    // Predicated region
    $region26: #{tpu_custom_call.1} parent=1 // pred_check
      _
    $region27: #{tpu_custom_call.1} parent=1 // pred_check_branch
      %57 = sbr.rel (0) target = $region29
    $region28: #{tpu_custom_call.1} parent=1 // pred_region
      %58 = dma.done [#allocation3], 384
    $region29: #{tpu_custom_call.1} parent=1 // pred_fallthru
      _
    // Predicated region
    $region30: #{tpu_custom_call.1} parent=1 // pred_check
      _
    $region31: #{tpu_custom_call.1} parent=1 // pred_check_branch
      %60 = sbr.rel (0) target = $region33
    $region32: #{tpu_custom_call.1} parent=1 // pred_region
      %61 = dma.done [#allocation6], 512
    $region33: #{tpu_custom_call.1} parent=1 // pred_fallthru
      _
    // Predicated region
    $region34: #{tpu_custom_call.1} parent=1 // pred_check
      _
    $region35: #{tpu_custom_call.1} parent=1 // pred_check_branch
      %63 = sbr.rel (0) target = $region37
    $region36: #{tpu_custom_call.1} parent=1 // pred_region
      %64 = dma.done [#allocation6], 1024
    $region37: #{tpu_custom_call.1} parent=1 // pred_fallthru
      _
    %v66 = vld [vmem:[#allocation2] sm:$0xff]
    %v67 = vld [vmem:[#allocation2 + $0x8] sm:$0xff]
    %v68 = vld [vmem:[#allocation2 + $0x10] sm:$0xf]
    %v69 = vpack.c.bf16 %v67, %v66
    %v70 = vpack.c.bf16 %v68, %v68
    %v71 = vld [vmem:[#allocation5] sm:$0xf]
    %v72 = vld [vmem:[#allocation5 + $0x4] sm:$0xf]
    %v73 = vld [vmem:[#allocation5 + $0x8] sm:$0xf]
    %v74 = vld [vmem:[#allocation5 + $0xc] sm:$0xf]
    %v75 = vld [vmem:[#allocation5 + $0x10] sm:$0xf]
    %v76 = vld [vmem:[#allocation5 + $0x14] sm:$0xf]
    %v77 = vld [vmem:[#allocation5 + $0x18] sm:$0xf]
    %v78 = vld [vmem:[#allocation5 + $0x1c] sm:$0xf]
    %v87 = vunpack.c.l.b16 %v71
    %v88 = vunpack.c.l.b16 %v72
    %v89 = vunpack.c.l.b16 %v73
    %v90 = vunpack.c.l.b16 %v74
    %v91 = vunpack.c.l.b16 %v75
    %v92 = vunpack.c.l.b16 %v76
    %v93 = vunpack.c.l.b16 %v77
    %v94 = vunpack.c.l.b16 %v78
    %v95 = vpack.c.b16 %v88, %v87
    %v96 = vpack.c.b16 %v90, %v89
    %v97 = vpack.c.b16 %v92, %v91
    %v98 = vpack.c.b16 %v94, %v93
    %vm103 = vcmask 523264
    %v105 = vsel %vm103, %v69, 0
    %v108 = vsel %vm103, %v70, 0
    %110 = vmatprep.subr.bf16.mxu0 0
    %111 = vmatpush1.bf16.msra.mxu0 %v95
    %112 = vmatprep.subr.bf16.mxu0 0
    %113 = vmatpush1.bf16.msra.mxu0 %v96
    %114 = vmatprep.subr.bf16.mxu0 0
    %115 = vmatpush1.bf16.msra.mxu0 %v97
    %116 = vmatprep.subr.bf16.mxu0 0
    %117 = vmatpush1.bf16.msra.mxu0 %v98
    %118 = vmatprep.subr.bf16.mxu0 0
    %119 = vmatpush1.bf16.msra.mxu0 0
    %120 = vmatprep.subr.bf16.mxu0 0
    %121 = vmatpush1.bf16.msra.mxu0 0
    %122 = vmatprep.subr.bf16.mxu0 0
    %123 = vmatpush1.bf16.msra.mxu0 0
    %124 = vmatprep.subr.bf16.mxu0 0
    %125 = vmatpush1.bf16.msra.mxu0 0
    %126 = vmatprep.subr.bf16.mxu0 0
    %127 = vmatpush1.bf16.msra.mxu0 0
    %128 = vmatprep.subr.bf16.mxu0 0
    %129 = vmatpush1.bf16.msra.mxu0 0
    %130 = vmatprep.subr.bf16.mxu0 0
    %131 = vmatpush1.bf16.msra.mxu0 0
    %132 = vmatprep.subr.bf16.mxu0 0
    %133 = vmatpush1.bf16.msra.mxu0 0
    %134 = vmatprep.subr.bf16.mxu0 0
    %135 = vmatpush1.bf16.msra.mxu0 0
    %136 = vmatprep.subr.bf16.mxu0 0
    %137 = vmatpush1.bf16.msra.mxu0 0
    %138 = vmatprep.subr.bf16.mxu0 0
    %139 = vmatpush1.bf16.msra.mxu0 0
    %140 = vmatprep.subr.bf16.mxu0 0
    %141 = vmatpush1.bf16.msra.mxu0 0
    %142 = vmatprep.mubr.bf16.mxu0 0
    %143 = vmatmul.mubr.bf16.gmra.mrb[0].mxu0 %v105
    %v144 = vpop.f32.mrb[0].mxu0
    %v145 = vadd.f32 0.0, %v144
    %v146 = vpop.f32.mrb[0].mxu0
    %v147 = vpop.f32.mrb[0].mxu0
    %v148 = vadd.f32 0.0, %v147
    %v149 = vpop.f32.mrb[0].mxu0
    %150 = vmatprep.mubr.bf16.mxu0 0
    %151 = vmatmul.mubr.bf16.gmra.mrb[0].mxu0 %v108
    %v152 = vpop.f32.mrb[0].mxu0
    %v153 = vadd.f32 0.0, %v152
    %v154 = vpop.f32.mrb[0].mxu0
    %v155 = vpop.f32.mrb[0].mxu0
    %v156 = vpop.f32.mrb[0].mxu0
    %157 = vdwg.mxu0
    %v158 = vld [vmem:[%s2] sm:$0x1]
    %v160 = vlaneseq
    %v161 = vshrl.u32 %v160, 7
    %v162 = vsub.s32 0, %v161
    %v163 = vrot.slane %v158, %v162
    %v165 = vmul.f32 %v145, %v163
    %v166 = vmul.f32 %v148, %v163
    %v167 = vmul.f32 %v153, %v163
    %v168 = vld [vmem:[%s3] sm:$0x1]
    %v170 = vlaneseq
    %v171 = vshrl.u32 %v170, 7
    %v172 = vsub.s32 0, %v171
    %v173 = vrot.slane %v168, %v172
    %v175 = vadd.f32 %v165, %v173
    %v176 = vadd.f32 %v166, %v173
    %v177 = vadd.f32 %v167, %v173
    %v178 = vmul.f32 %v175, 0.1
    %v179 = vmul.f32 %v176, 0.1
    %v180 = vmul.f32 %v177, 0.1
    %v181 = vmax.f32 %v175, %v178
    %v182 = vmax.f32 %v176, %v179
    %v183 = vmax.f32 %v177, %v180
    %v184 = vpack.c.bf16 %v182, %v181
    %v185 = vpack.c.bf16 %v183, %v183
    %v186 = vld [vmem:[#allocation7] sm:$0xf]
    %v187 = vld [vmem:[#allocation7 + $0x4] sm:$0xf]
    %v188 = vld [vmem:[#allocation7 + $0x8] sm:$0xf]
    %v189 = vld [vmem:[#allocation7 + $0xc] sm:$0xf]
    %v190 = vld [vmem:[#allocation7 + $0x10] sm:$0xf]
    %v191 = vld [vmem:[#allocation7 + $0x14] sm:$0xf]
    %v192 = vld [vmem:[#allocation7 + $0x18] sm:$0xf]
    %v193 = vld [vmem:[#allocation7 + $0x1c] sm:$0xf]
    %v194 = vld [vmem:[#allocation7 + $0x20] sm:$0xf]
    %v195 = vld [vmem:[#allocation7 + $0x24] sm:$0xf]
    %v196 = vld [vmem:[#allocation7 + $0x28] sm:$0xf]
    %v197 = vld [vmem:[#allocation7 + $0x2c] sm:$0xf]
    %v198 = vld [vmem:[#allocation7 + $0x30] sm:$0xf]
    %v199 = vld [vmem:[#allocation7 + $0x34] sm:$0xf]
    %v200 = vld [vmem:[#allocation7 + $0x38] sm:$0xf]
    %v201 = vld [vmem:[#allocation7 + $0x3c] sm:$0xf]
    %v202 = vld [vmem:[%s5] sm:$0x1]
    %v204 = vlaneseq
    %v205 = vshrl.u32 %v204, 7
    %v206 = vsub.s32 0, %v205
    %v207 = vrot.slane %v202, %v206
    %v225 = vunpack.c.l.b16 %v186
    %v226 = vunpack.c.l.b16 %v187
    %v227 = vunpack.c.l.b16 %v188
    %v228 = vunpack.c.l.b16 %v189
    %v229 = vunpack.c.l.b16 %v190
    %v230 = vunpack.c.l.b16 %v191
    %v231 = vunpack.c.l.b16 %v192
    %v232 = vunpack.c.l.b16 %v193
    %v233 = vunpack.c.l.b16 %v194
    %v234 = vunpack.c.l.b16 %v195
    %v235 = vunpack.c.l.b16 %v196
    %v236 = vunpack.c.l.b16 %v197
    %v237 = vunpack.c.l.b16 %v198
    %v238 = vunpack.c.l.b16 %v199
    %v239 = vunpack.c.l.b16 %v200
    %v240 = vunpack.c.l.b16 %v201
    %v241 = vpack.c.b16 %v226, %v225
    %v242 = vpack.c.b16 %v228, %v227
    %v243 = vpack.c.b16 %v230, %v229
    %v244 = vpack.c.b16 %v232, %v231
    %v245 = vpack.c.b16 %v234, %v233
    %v246 = vpack.c.b16 %v236, %v235
    %v247 = vpack.c.b16 %v238, %v237
    %v248 = vpack.c.b16 %v240, %v239
    %257 = vmatprep.subr.bf16.mxu0 0
    %258 = vmatpush1.bf16.msra.mxu0 %v241
    %259 = vmatprep.subr.bf16.mxu0 0
    %260 = vmatpush1.bf16.msra.mxu0 %v242
    %261 = vmatprep.subr.bf16.mxu0 0
    %262 = vmatpush1.bf16.msra.mxu0 %v243
    %263 = vmatprep.subr.bf16.mxu0 0
    %264 = vmatpush1.bf16.msra.mxu0 %v244
    %265 = vmatprep.subr.bf16.mxu0 0
    %266 = vmatpush1.bf16.msra.mxu0 %v245
    %267 = vmatprep.subr.bf16.mxu0 0
    %268 = vmatpush1.bf16.msra.mxu0 %v246
    %269 = vmatprep.subr.bf16.mxu0 0
    %270 = vmatpush1.bf16.msra.mxu0 %v247
    %271 = vmatprep.subr.bf16.mxu0 0
    %272 = vmatpush1.bf16.msra.mxu0 %v248
    %273 = vmatprep.subr.bf16.mxu0 0
    %274 = vmatpush1.bf16.msra.mxu0 0
    %275 = vmatprep.subr.bf16.mxu0 0
    %276 = vmatpush1.bf16.msra.mxu0 0
    %277 = vmatprep.subr.bf16.mxu0 0
    %278 = vmatpush1.bf16.msra.mxu0 0
    %279 = vmatprep.subr.bf16.mxu0 0
    %280 = vmatpush1.bf16.msra.mxu0 0
    %281 = vmatprep.subr.bf16.mxu0 0
    %282 = vmatpush1.bf16.msra.mxu0 0
    %283 = vmatprep.subr.bf16.mxu0 0
    %284 = vmatpush1.bf16.msra.mxu0 0
    %285 = vmatprep.subr.bf16.mxu0 0
    %286 = vmatpush1.bf16.msra.mxu0 0
    %287 = vmatprep.subr.bf16.mxu0 0
    %288 = vmatpush1.bf16.msra.mxu0 0
    %289 = vmatprep.mubr.bf16.mxu0 0
    %290 = vmatmul.mubr.bf16.gmra.mrb[0].mxu0 %v184
    %v291 = vpop.f32.mrb[0].mxu0
    %v292 = vadd.f32 %v207, %v291
    %v293 = vpop.f32.mrb[0].mxu0
    %v294 = vpop.f32.mrb[0].mxu0
    %v295 = vadd.f32 %v207, %v294
    %v296 = vpop.f32.mrb[0].mxu0
    %297 = vmatprep.mubr.bf16.mxu0 0
    %298 = vmatmul.mubr.bf16.gmra.mrb[0].mxu0 %v185
    %v299 = vpop.f32.mrb[0].mxu0
    %v300 = vadd.f32 %v207, %v299
    %v301 = vpop.f32.mrb[0].mxu0
    %v302 = vpop.f32.mrb[0].mxu0
    %v303 = vpop.f32.mrb[0].mxu0
    %304 = vdwg.mxu0
    %305 = vst [vmem:[#allocation8] sm:$0xff] %v292
    %306 = vst [vmem:[#allocation8 + $0x8] sm:$0xff] %v295
    %307 = vst [vmem:[#allocation8 + $0x10] sm:$0xf] %v300
    // Predicated region
    $region38: #{tpu_custom_call.1} parent=1 // pred_check
      _
    $region39: #{tpu_custom_call.1} parent=1 // pred_check_branch
      %309 = sbr.rel (0) target = $region41
    $region40: #{tpu_custom_call.1} parent=1 // pred_region
      %s311 = ssub.s32 384, 384
      %312 = vsyncadd [#allocation4], %s311
      %s313 = sshll.u32 [#allocation8], 4
      %s314 = int_to_ptr.vmem [resolvable:$true] %s313
      %319 = dma.vmem_to_hbm [thread:$0]  %s314, 384, %s6, [#allocation4], 128, 128, 8
    $region41: #{tpu_custom_call.1} parent=1 // pred_fallthru
      _
    // Predicated region
    $region42: #{tpu_custom_call.1} parent=1 // pred_check
      _
    $region43: #{tpu_custom_call.1} parent=1 // pred_check_branch
      %321 = sbr.rel (0) target = $region45
    $region44: #{tpu_custom_call.1} parent=1 // pred_region
      %322 = dma.done [#allocation4], 384
    $region45: #{tpu_custom_call.1} parent=1 // pred_fallthru
      _
    %323 = vsyncpa [#allocation3], 1
    %324 = vsyncpa [#allocation6], 1
    %325 = vsyncpa [#allocation4], 1

</llo_original>
